<compile_context>
chip_gen: v7x
topology: tpu7x:2x2x1
jax: 0.10.0
libtpu: 0.0.40
codegen_flags: <defaults>
</compile_context>

<pallas_src>
import numpy as np
import jax
import jax.numpy as jnp
from jax.experimental import pallas as pl
from jax.experimental.pallas import tpu as pltpu

N_TX = 2
N_RX = 2


def _make_channel_kernel(half_rows):
    """half_rows = R: rows per real/imag plane; L = R*128 complex symbols."""
    R = half_rows
    inv_L = np.float32(1.0 / (R * 128))

    def kernel(coef_ref, snr_ref, x_ref, z_ref, out_ref):
        # antenna / rx index of a flat complex slot is its lane parity
        # (128 is even, so (tx0, tx1) pairs never straddle a row boundary).
        lane = jax.lax.broadcasted_iota(jnp.int32, (1, 128), 1)
        even = (lane & 1) == 0                       # (1,128), broadcasts over rows

        def coef_planes(base):
            # For out[p] = cs[p]*x[p] + co[p]*x[partner(p)]:
            #   even slot (out antenna 0): cs = M00, co = M01
            #   odd  slot (out antenna 1): cs = M11, co = M10
            # coef layout per matrix: [M00r,M01r,M10r,M11r, M00i,M01i,M10i,M11i]
            cs_r = jnp.where(even, coef_ref[base + 0], coef_ref[base + 3])
            cs_i = jnp.where(even, coef_ref[base + 4], coef_ref[base + 7])
            co_r = jnp.where(even, coef_ref[base + 1], coef_ref[base + 2])
            co_i = jnp.where(even, coef_ref[base + 5], coef_ref[base + 6])
            return cs_r, cs_i, co_r, co_i             # all (1,128)

        def partner(a):
            # partner[p] = a[p+1] on even lanes, a[p-1] on odd lanes;
            # the wrapped-around lanes are never selected.
            return jnp.where(even,
                             jnp.roll(a, -1, axis=1),
                             jnp.roll(a, 1, axis=1))

        def pair_mix(coefs, ar, ai):
            cs_r, cs_i, co_r, co_i = coefs
            pr = partner(ar)
            pi = partner(ai)
            o_r = cs_r * ar - cs_i * ai + co_r * pr - co_i * pi
            o_i = cs_r * ai + cs_i * ar + co_r * pi + co_i * pr
            return o_r, o_i

        h_coefs = coef_planes(0)    # H
        g_coefs = coef_planes(8)    # pinv(H)

        xr = x_ref[0]               # (R,128) real plane (tile-aligned slice)
        xi = x_ref[1]               # (R,128) imag plane

        # mean |x_complex|^2 -- only needed for the very last rescale; the
        # tx-side normalisation cancels algebraically, so no pre-multiply.
        # TODO(synk): for very large N use pairwise partial sums for precision.
        pwr = jnp.sum(xr * xr + xi * xi) * inv_L

        # ---- rx = H @ tx pairs (unnormalised domain) ----------------------
        rx_r, rx_i = pair_mix(h_coefs, xr, xi)
        rx_pwr = jnp.sum(rx_r * rx_r + rx_i * rx_i) * inv_L

        # ---- AWGN (unit normals streamed in; snr_ref[0] = 1/(2*snr_lin)) ---
        sigma = jnp.sqrt(rx_pwr * snr_ref[0])
        y_r = rx_r + sigma * z_ref[0]
        y_i = rx_i + sigma * z_ref[1]

        # ---- zero-forcing detection: d = pinv(H) @ rx_noisy pairs ----------
        d_r, d_i = pair_mix(g_coefs, y_r, y_i)
        det_pwr = jnp.sum(d_r * d_r + d_i * d_i) * inv_L

        # detected * sqrt(1/det_power) * sqrt(pwr)
        scale = jnp.sqrt(pwr) * jax.lax.rsqrt(det_pwr)
        out_ref[0] = d_r * scale
        out_ref[1] = d_i * scale

    return kernel


def _vmem_capacity_bytes():
    try:
        return int(pltpu.get_tpu_info().vmem_capacity_bytes)
    except Exception:
        return 128 * 2 ** 20       # v5e / v6e default; v7x is 64 MiB


def mimo_channel_forward(x, chan_param_db, H, H_inv, key, return_noise=False):
    """Pallas-backed equivalent of Channel.forward(x, chan_param, avg_pwr=False).

    `key` drives the AWGN draw (the PyTorch module draws it internally).
    """
    # TODO(synk): the avg_pwr=True branch and the stateful coherence-time H
    # refresh (current_step counter / update_channel) are host-side concerns
    # and are not reproduced here.
    orig_shape = x.shape
    N = int(np.prod(orig_shape))
    if N % 256 != 0:
        raise ValueError(
            "flattened size must be a multiple of 256 (2 antennas x 128 lanes), "
            f"got {N}")
    L = N // 2
    half = L // 128

    # (2, R, 128): plane 0 = real parts, plane 1 = imag parts.  Free reshape.
    x3d = x.reshape(2, half, 128).astype(jnp.float32)
    noise = jax.random.normal(key, (2, half, 128), dtype=jnp.float32)

    # Pack both 2x2 complex matrices into one tiny SMEM vector.
    coefs = jnp.concatenate([
        jnp.real(H).astype(jnp.float32).reshape(-1),
        jnp.imag(H).astype(jnp.float32).reshape(-1),
        jnp.real(H_inv).astype(jnp.float32).reshape(-1),
        jnp.imag(H_inv).astype(jnp.float32).reshape(-1),
    ])                                                # (16,)

    # 1 / (2 * snr_linear): computed outside the kernel's serial scalar path.
    inv_2snr = jnp.reshape(
        0.5 * 10.0 ** (-jnp.asarray(chan_param_db, jnp.float32) / 10.0), (1,))

    # Generation-aware VMEM budget: inputs (x, z), output, rx/y/d temporaries.
    plane_bytes = half * 128 * 4
    need_bytes = 24 * plane_bytes + (2 << 20)
    budget = int(0.75 * _vmem_capacity_bytes())
    if need_bytes > budget:
        # TODO(synk): gridded two-pass streaming variant (SMEM partial power
        # sums + per-block apply, megacore 'parallel' axis) for large maps.
        raise ValueError(
            f"feature map needs ~{need_bytes >> 20} MiB of VMEM but only "
            f"{budget >> 20} MiB are available on this generation; the "
            "single-block kernel targets typical JSCC latent sizes")
    vmem_limit = max(16 << 20, min(budget, 4 * need_bytes))

    smem = pl.BlockSpec(memory_space=pltpu.MemorySpace.SMEM)
    vmem = pl.BlockSpec(memory_space=pltpu.MemorySpace.VMEM)

    out = pl.pallas_call(
        _make_channel_kernel(half),
        out_shape=jax.ShapeDtypeStruct((2, half, 128), jnp.float32),
        in_specs=[smem, smem, vmem, vmem],
        out_specs=vmem,
        compiler_params=pltpu.CompilerParams(vmem_limit_bytes=vmem_limit),
    )(coefs, inv_2snr, x3d, noise)

    out = out.reshape(orig_shape)
    if return_noise:
        return out, noise
    return out


def reference_forward(x, chan_param_db, H, H_inv, noise):
    """Pure-JAX (complex64) reference mirroring the PyTorch forward, given the
    unit-normal noise used by the kernel (noise[0]=real plane, noise[1]=imag)."""
    orig_shape = x.shape
    flat = x.reshape(-1).astype(jnp.float32)
    L = flat.shape[0] // 2
    xc = flat[:L] + 1j * flat[L:]
    pwr = jnp.mean(jnp.abs(xc) ** 2)
    tx_c = jnp.sqrt(1.0 / N_TX) * xc / jnp.sqrt(pwr)
    S = L // N_TX
    tx = tx_c.reshape(S, N_TX)
    rx = tx @ H.T
    rx_power = jnp.mean(jnp.abs(rx) ** 2)
    snr_linear = 10.0 ** (chan_param_db / 10.0)
    noise_std = jnp.sqrt(rx_power / snr_linear)
    z = noise.reshape(2, L)
    noise_c = (z[0] + 1j * z[1]) * (noise_std / jnp.sqrt(2.0))
    y = rx + noise_c.reshape(S, N_TX)
    det = y @ H_inv.T
    det_power = jnp.mean(jnp.abs(det) ** 2)
    det = det * jnp.sqrt(1.0 / det_power)
    comb = det.reshape(-1)
    out = jnp.concatenate([jnp.real(comb), jnp.imag(comb)]).reshape(orig_shape)
    return out * jnp.sqrt(pwr)


if __name__ == "__main__":
    key = jax.random.PRNGKey(0)
    kx, kh1, kh2, kn = jax.random.split(key, 4)

    # input consistent with a (B, C, H, W) NCHW feature map
    x = jax.random.normal(kx, (2, 4, 16, 16), dtype=jnp.float32)
    chan_param_db = 10.0  # SNR in dB

    # deterministic 2x2 complex channel matrix and its pseudo-inverse
    H = ((jax.random.normal(kh1, (N_RX, N_TX), dtype=jnp.float32)
          + 1j * jax.random.normal(kh2, (N_RX, N_TX), dtype=jnp.float32))
         / np.sqrt(2.0)).astype(jnp.complex64)
    H_inv = jnp.asarray(np.linalg.pinv(np.asarray(H)), dtype=jnp.complex64)

    # 1) kernel vs. pure-JAX complex reference using the same unit normals
    out, noise = mimo_channel_forward(x, chan_param_db, H, H_inv, kn,
                                      return_noise=True)
    out = jax.block_until_ready(out)
    ref = jax.block_until_ready(reference_forward(x, chan_param_db, H, H_inv, noise))
    assert out.shape == x.shape and out.dtype == jnp.float32
    np.testing.assert_allclose(np.asarray(out), np.asarray(ref),
                               rtol=5e-3, atol=5e-3)

    # 2) exact power-preservation property: mean|out_complex|^2 == mean|x_complex|^2
    flat_o = np.asarray(out).reshape(-1)
    flat_x = np.asarray(x).reshape(-1)
    L = flat_x.size // 2
    pwr_o = np.mean(flat_o[:L] ** 2 + flat_o[L:] ** 2)
    pwr_x = np.mean(flat_x[:L] ** 2 + flat_x[L:] ** 2)
    np.testing.assert_allclose(pwr_o, pwr_x, rtol=1e-3)

    print("KERNEL_OK")
</pallas_src>

<mosaic_0001>
module attributes {stable_mosaic.version = 11 : i64} {
  func.func @kernel(%arg0: memref<16xf32, #tpu.memory_space<smem>>, %arg1: memref<1xf32, #tpu.memory_space<smem>>, %arg2: memref<2x8x128xf32, #tpu.memory_space<vmem>>, %arg3: memref<2x8x128xf32, #tpu.memory_space<vmem>>, %arg4: memref<2x8x128xf32, #tpu.memory_space<vmem>>) attributes {dimension_semantics = [], scalar_prefetch = 0 : i64, scratch_operands = 0 : i64, tpu.core_type = #tpu.core_type<tc>} {
    %0 = tpu.iota {dimensions = array<i32: 1>} : vector<1x128xi32>
    %c1_i32 = arith.constant 1 : i32
    %1 = vector.broadcast %c1_i32 : i32 to vector<1x128xi32>
    %2 = arith.andi %0, %1 : vector<1x128xi32>
    %c0_i32 = arith.constant 0 : i32
    %3 = vector.broadcast %c0_i32 : i32 to vector<1x128xi32>
    %4 = arith.cmpi eq, %2, %3 : vector<1x128xi32>
    %c0 = arith.constant 0 : index
    %5 = memref.load %arg0[%c0] : memref<16xf32, #tpu.memory_space<smem>>
    %c3 = arith.constant 3 : index
    %6 = memref.load %arg0[%c3] : memref<16xf32, #tpu.memory_space<smem>>
    %7 = vector.broadcast %5 : f32 to vector<1x128xf32>
    %8 = vector.broadcast %6 : f32 to vector<1x128xf32>
    %9 = arith.select %4, %7, %8 : vector<1x128xi1>, vector<1x128xf32>
    %c4 = arith.constant 4 : index
    %10 = memref.load %arg0[%c4] : memref<16xf32, #tpu.memory_space<smem>>
    %c7 = arith.constant 7 : index
    %11 = memref.load %arg0[%c7] : memref<16xf32, #tpu.memory_space<smem>>
    %12 = vector.broadcast %10 : f32 to vector<1x128xf32>
    %13 = vector.broadcast %11 : f32 to vector<1x128xf32>
    %14 = arith.select %4, %12, %13 : vector<1x128xi1>, vector<1x128xf32>
    %c1 = arith.constant 1 : index
    %15 = memref.load %arg0[%c1] : memref<16xf32, #tpu.memory_space<smem>>
    %c2 = arith.constant 2 : index
    %16 = memref.load %arg0[%c2] : memref<16xf32, #tpu.memory_space<smem>>
    %17 = vector.broadcast %15 : f32 to vector<1x128xf32>
    %18 = vector.broadcast %16 : f32 to vector<1x128xf32>
    %19 = arith.select %4, %17, %18 : vector<1x128xi1>, vector<1x128xf32>
    %c5 = arith.constant 5 : index
    %20 = memref.load %arg0[%c5] : memref<16xf32, #tpu.memory_space<smem>>
    %c6 = arith.constant 6 : index
    %21 = memref.load %arg0[%c6] : memref<16xf32, #tpu.memory_space<smem>>
    %22 = vector.broadcast %20 : f32 to vector<1x128xf32>
    %23 = vector.broadcast %21 : f32 to vector<1x128xf32>
    %24 = arith.select %4, %22, %23 : vector<1x128xi1>, vector<1x128xf32>
    %c8 = arith.constant 8 : index
    %25 = memref.load %arg0[%c8] : memref<16xf32, #tpu.memory_space<smem>>
    %c11 = arith.constant 11 : index
    %26 = memref.load %arg0[%c11] : memref<16xf32, #tpu.memory_space<smem>>
    %27 = vector.broadcast %25 : f32 to vector<1x128xf32>
    %28 = vector.broadcast %26 : f32 to vector<1x128xf32>
    %29 = arith.select %4, %27, %28 : vector<1x128xi1>, vector<1x128xf32>
    %c12 = arith.constant 12 : index
    %30 = memref.load %arg0[%c12] : memref<16xf32, #tpu.memory_space<smem>>
    %c15 = arith.constant 15 : index
    %31 = memref.load %arg0[%c15] : memref<16xf32, #tpu.memory_space<smem>>
    %32 = vector.broadcast %30 : f32 to vector<1x128xf32>
    %33 = vector.broadcast %31 : f32 to vector<1x128xf32>
    %34 = arith.select %4, %32, %33 : vector<1x128xi1>, vector<1x128xf32>
    %c9 = arith.constant 9 : index
    %35 = memref.load %arg0[%c9] : memref<16xf32, #tpu.memory_space<smem>>
    %c10 = arith.constant 10 : index
    %36 = memref.load %arg0[%c10] : memref<16xf32, #tpu.memory_space<smem>>
    %37 = vector.broadcast %35 : f32 to vector<1x128xf32>
    %38 = vector.broadcast %36 : f32 to vector<1x128xf32>
    %39 = arith.select %4, %37, %38 : vector<1x128xi1>, vector<1x128xf32>
    %c13 = arith.constant 13 : index
    %40 = memref.load %arg0[%c13] : memref<16xf32, #tpu.memory_space<smem>>
    %c14 = arith.constant 14 : index
    %41 = memref.load %arg0[%c14] : memref<16xf32, #tpu.memory_space<smem>>
    %42 = vector.broadcast %40 : f32 to vector<1x128xf32>
    %43 = vector.broadcast %41 : f32 to vector<1x128xf32>
    %44 = arith.select %4, %42, %43 : vector<1x128xi1>, vector<1x128xf32>
    %c0_0 = arith.constant 0 : index
    %c0_1 = arith.constant 0 : index
    %c0_2 = arith.constant 0 : index
    %45 = vector.load %arg2[%c0_0, %c0_1, %c0_2] : memref<2x8x128xf32, #tpu.memory_space<vmem>>, vector<1x8x128xf32>
    %46 = vector.shape_cast %45 : vector<1x8x128xf32> to vector<8x128xf32>
    %c1_3 = arith.constant 1 : index
    %c0_4 = arith.constant 0 : index
    %c0_5 = arith.constant 0 : index
    %47 = vector.load %arg2[%c1_3, %c0_4, %c0_5] : memref<2x8x128xf32, #tpu.memory_space<vmem>>, vector<1x8x128xf32>
    %48 = vector.shape_cast %47 : vector<1x8x128xf32> to vector<8x128xf32>
    %49 = arith.mulf %46, %46 : vector<8x128xf32>
    %50 = arith.mulf %48, %48 : vector<8x128xf32>
    %51 = arith.addf %49, %50 : vector<8x128xf32>
    %52 = vector.shape_cast %51 : vector<8x128xf32> to vector<1x8x128xf32>
    %cst = arith.constant dense<0.000000e+00> : vector<1xf32>
    %53 = vector.multi_reduction <add>, %52, %cst [1, 2] : vector<1x8x128xf32> to vector<1xf32>
    %54 = vector.shape_cast %53 : vector<1xf32> to vector<1x1x1xf32>
    %55 = vector.extract %54[0, 0, 0] : f32 from vector<1x1x1xf32>
    %cst_6 = arith.constant 9.765625E-4 : f32
    %56 = arith.mulf %55, %cst_6 : f32
    %57 = vector.extract_strided_slice %46 {offsets = [0, 1], sizes = [8, 127], strides = [1, 1]} : vector<8x128xf32> to vector<8x127xf32>
    %58 = vector.extract_strided_slice %46 {offsets = [0, 0], sizes = [8, 1], strides = [1, 1]} : vector<8x128xf32> to vector<8x1xf32>
    %59 = tpu.concatenate %57, %58 in 1 : vector<8x127xf32>, vector<8x1xf32> -> vector<8x128xf32>
    %60 = vector.extract_strided_slice %46 {offsets = [0, 127], sizes = [8, 1], strides = [1, 1]} : vector<8x128xf32> to vector<8x1xf32>
    %61 = vector.extract_strided_slice %46 {offsets = [0, 0], sizes = [8, 127], strides = [1, 1]} : vector<8x128xf32> to vector<8x127xf32>
    %62 = tpu.concatenate %60, %61 in 1 : vector<8x1xf32>, vector<8x127xf32> -> vector<8x128xf32>
    %63 = vector.shape_cast %4 : vector<1x128xi1> to vector<1x128xi1>
    %64 = vector.broadcast %63 : vector<1x128xi1> to vector<8x128xi1>
    %65 = arith.select %64, %59, %62 : vector<8x128xi1>, vector<8x128xf32>
    %66 = vector.extract_strided_slice %48 {offsets = [0, 1], sizes = [8, 127], strides = [1, 1]} : vector<8x128xf32> to vector<8x127xf32>
    %67 = vector.extract_strided_slice %48 {offsets = [0, 0], sizes = [8, 1], strides = [1, 1]} : vector<8x128xf32> to vector<8x1xf32>
    %68 = tpu.concatenate %66, %67 in 1 : vector<8x127xf32>, vector<8x1xf32> -> vector<8x128xf32>
    %69 = vector.extract_strided_slice %48 {offsets = [0, 127], sizes = [8, 1], strides = [1, 1]} : vector<8x128xf32> to vector<8x1xf32>
    %70 = vector.extract_strided_slice %48 {offsets = [0, 0], sizes = [8, 127], strides = [1, 1]} : vector<8x128xf32> to vector<8x127xf32>
    %71 = tpu.concatenate %69, %70 in 1 : vector<8x1xf32>, vector<8x127xf32> -> vector<8x128xf32>
    %72 = vector.shape_cast %4 : vector<1x128xi1> to vector<1x128xi1>
    %73 = vector.broadcast %72 : vector<1x128xi1> to vector<8x128xi1>
    %74 = arith.select %73, %68, %71 : vector<8x128xi1>, vector<8x128xf32>
    %75 = vector.broadcast %9 : vector<1x128xf32> to vector<8x128xf32>
    %76 = arith.mulf %75, %46 : vector<8x128xf32>
    %77 = vector.broadcast %14 : vector<1x128xf32> to vector<8x128xf32>
    %78 = arith.mulf %77, %48 : vector<8x128xf32>
    %79 = arith.subf %76, %78 : vector<8x128xf32>
    %80 = vector.broadcast %19 : vector<1x128xf32> to vector<8x128xf32>
    %81 = arith.mulf %80, %65 : vector<8x128xf32>
    %82 = arith.addf %79, %81 : vector<8x128xf32>
    %83 = vector.broadcast %24 : vector<1x128xf32> to vector<8x128xf32>
    %84 = arith.mulf %83, %74 : vector<8x128xf32>
    %85 = arith.subf %82, %84 : vector<8x128xf32>
    %86 = vector.broadcast %9 : vector<1x128xf32> to vector<8x128xf32>
    %87 = arith.mulf %86, %48 : vector<8x128xf32>
    %88 = vector.broadcast %14 : vector<1x128xf32> to vector<8x128xf32>
    %89 = arith.mulf %88, %46 : vector<8x128xf32>
    %90 = arith.addf %87, %89 : vector<8x128xf32>
    %91 = vector.broadcast %19 : vector<1x128xf32> to vector<8x128xf32>
    %92 = arith.mulf %91, %74 : vector<8x128xf32>
    %93 = arith.addf %90, %92 : vector<8x128xf32>
    %94 = vector.broadcast %24 : vector<1x128xf32> to vector<8x128xf32>
    %95 = arith.mulf %94, %65 : vector<8x128xf32>
    %96 = arith.addf %93, %95 : vector<8x128xf32>
    %97 = arith.mulf %85, %85 : vector<8x128xf32>
    %98 = arith.mulf %96, %96 : vector<8x128xf32>
    %99 = arith.addf %97, %98 : vector<8x128xf32>
    %100 = vector.shape_cast %99 : vector<8x128xf32> to vector<1x8x128xf32>
    %cst_7 = arith.constant dense<0.000000e+00> : vector<1xf32>
    %101 = vector.multi_reduction <add>, %100, %cst_7 [1, 2] : vector<1x8x128xf32> to vector<1xf32>
    %102 = vector.shape_cast %101 : vector<1xf32> to vector<1x1x1xf32>
    %103 = vector.extract %102[0, 0, 0] : f32 from vector<1x1x1xf32>
    %cst_8 = arith.constant 9.765625E-4 : f32
    %104 = arith.mulf %103, %cst_8 : f32
    %c0_9 = arith.constant 0 : index
    %105 = memref.load %arg1[%c0_9] : memref<1xf32, #tpu.memory_space<smem>>
    %106 = arith.mulf %104, %105 : f32
    %107 = math.sqrt %106 : f32
    %c0_10 = arith.constant 0 : index
    %c0_11 = arith.constant 0 : index
    %c0_12 = arith.constant 0 : index
    %108 = vector.load %arg3[%c0_10, %c0_11, %c0_12] : memref<2x8x128xf32, #tpu.memory_space<vmem>>, vector<1x8x128xf32>
    %109 = vector.shape_cast %108 : vector<1x8x128xf32> to vector<8x128xf32>
    %110 = vector.broadcast %107 : f32 to vector<8x128xf32>
    %111 = arith.mulf %110, %109 : vector<8x128xf32>
    %112 = arith.addf %85, %111 : vector<8x128xf32>
    %c1_13 = arith.constant 1 : index
    %c0_14 = arith.constant 0 : index
    %c0_15 = arith.constant 0 : index
    %113 = vector.load %arg3[%c1_13, %c0_14, %c0_15] : memref<2x8x128xf32, #tpu.memory_space<vmem>>, vector<1x8x128xf32>
    %114 = vector.shape_cast %113 : vector<1x8x128xf32> to vector<8x128xf32>
    %115 = vector.broadcast %107 : f32 to vector<8x128xf32>
    %116 = arith.mulf %115, %114 : vector<8x128xf32>
    %117 = arith.addf %96, %116 : vector<8x128xf32>
    %118 = vector.extract_strided_slice %112 {offsets = [0, 1], sizes = [8, 127], strides = [1, 1]} : vector<8x128xf32> to vector<8x127xf32>
    %119 = vector.extract_strided_slice %112 {offsets = [0, 0], sizes = [8, 1], strides = [1, 1]} : vector<8x128xf32> to vector<8x1xf32>
    %120 = tpu.concatenate %118, %119 in 1 : vector<8x127xf32>, vector<8x1xf32> -> vector<8x128xf32>
    %121 = vector.extract_strided_slice %112 {offsets = [0, 127], sizes = [8, 1], strides = [1, 1]} : vector<8x128xf32> to vector<8x1xf32>
    %122 = vector.extract_strided_slice %112 {offsets = [0, 0], sizes = [8, 127], strides = [1, 1]} : vector<8x128xf32> to vector<8x127xf32>
    %123 = tpu.concatenate %121, %122 in 1 : vector<8x1xf32>, vector<8x127xf32> -> vector<8x128xf32>
    %124 = vector.shape_cast %4 : vector<1x128xi1> to vector<1x128xi1>
    %125 = vector.broadcast %124 : vector<1x128xi1> to vector<8x128xi1>
    %126 = arith.select %125, %120, %123 : vector<8x128xi1>, vector<8x128xf32>
    %127 = vector.extract_strided_slice %117 {offsets = [0, 1], sizes = [8, 127], strides = [1, 1]} : vector<8x128xf32> to vector<8x127xf32>
    %128 = vector.extract_strided_slice %117 {offsets = [0, 0], sizes = [8, 1], strides = [1, 1]} : vector<8x128xf32> to vector<8x1xf32>
    %129 = tpu.concatenate %127, %128 in 1 : vector<8x127xf32>, vector<8x1xf32> -> vector<8x128xf32>
    %130 = vector.extract_strided_slice %117 {offsets = [0, 127], sizes = [8, 1], strides = [1, 1]} : vector<8x128xf32> to vector<8x1xf32>
    %131 = vector.extract_strided_slice %117 {offsets = [0, 0], sizes = [8, 127], strides = [1, 1]} : vector<8x128xf32> to vector<8x127xf32>
    %132 = tpu.concatenate %130, %131 in 1 : vector<8x1xf32>, vector<8x127xf32> -> vector<8x128xf32>
    %133 = vector.shape_cast %4 : vector<1x128xi1> to vector<1x128xi1>
    %134 = vector.broadcast %133 : vector<1x128xi1> to vector<8x128xi1>
    %135 = arith.select %134, %129, %132 : vector<8x128xi1>, vector<8x128xf32>
    %136 = vector.broadcast %29 : vector<1x128xf32> to vector<8x128xf32>
    %137 = arith.mulf %136, %112 : vector<8x128xf32>
    %138 = vector.broadcast %34 : vector<1x128xf32> to vector<8x128xf32>
    %139 = arith.mulf %138, %117 : vector<8x128xf32>
    %140 = arith.subf %137, %139 : vector<8x128xf32>
    %141 = vector.broadcast %39 : vector<1x128xf32> to vector<8x128xf32>
    %142 = arith.mulf %141, %126 : vector<8x128xf32>
    %143 = arith.addf %140, %142 : vector<8x128xf32>
    %144 = vector.broadcast %44 : vector<1x128xf32> to vector<8x128xf32>
    %145 = arith.mulf %144, %135 : vector<8x128xf32>
    %146 = arith.subf %143, %145 : vector<8x128xf32>
    %147 = vector.broadcast %29 : vector<1x128xf32> to vector<8x128xf32>
    %148 = arith.mulf %147, %117 : vector<8x128xf32>
    %149 = vector.broadcast %34 : vector<1x128xf32> to vector<8x128xf32>
    %150 = arith.mulf %149, %112 : vector<8x128xf32>
    %151 = arith.addf %148, %150 : vector<8x128xf32>
    %152 = vector.broadcast %39 : vector<1x128xf32> to vector<8x128xf32>
    %153 = arith.mulf %152, %135 : vector<8x128xf32>
    %154 = arith.addf %151, %153 : vector<8x128xf32>
    %155 = vector.broadcast %44 : vector<1x128xf32> to vector<8x128xf32>
    %156 = arith.mulf %155, %126 : vector<8x128xf32>
    %157 = arith.addf %154, %156 : vector<8x128xf32>
    %158 = arith.mulf %146, %146 : vector<8x128xf32>
    %159 = arith.mulf %157, %157 : vector<8x128xf32>
    %160 = arith.addf %158, %159 : vector<8x128xf32>
    %161 = vector.shape_cast %160 : vector<8x128xf32> to vector<1x8x128xf32>
    %cst_16 = arith.constant dense<0.000000e+00> : vector<1xf32>
    %162 = vector.multi_reduction <add>, %161, %cst_16 [1, 2] : vector<1x8x128xf32> to vector<1xf32>
    %163 = vector.shape_cast %162 : vector<1xf32> to vector<1x1x1xf32>
    %164 = vector.extract %163[0, 0, 0] : f32 from vector<1x1x1xf32>
    %cst_17 = arith.constant 9.765625E-4 : f32
    %165 = arith.mulf %164, %cst_17 : f32
    %166 = math.sqrt %56 : f32
    %167 = math.rsqrt %165 : f32
    %168 = arith.mulf %166, %167 : f32
    %169 = vector.broadcast %168 : f32 to vector<8x128xf32>
    %170 = arith.mulf %146, %169 : vector<8x128xf32>
    %c0_18 = arith.constant 0 : index
    %c0_19 = arith.constant 0 : index
    %c0_20 = arith.constant 0 : index
    %171 = vector.load %arg4[%c0_18, %c0_19, %c0_20] : memref<2x8x128xf32, #tpu.memory_space<vmem>>, vector<1x8x128xf32>
    %172 = vector.shape_cast %171 : vector<1x8x128xf32> to vector<8x128xf32>
    %173 = vector.shape_cast %170 : vector<8x128xf32> to vector<1x8x128xf32>
    tpu.vector_store %arg4[%c0_18, %c0_19, %c0_20], %173 {strides = array<i32>} : memref<2x8x128xf32, #tpu.memory_space<vmem>>, vector<1x8x128xf32>,
    %174 = vector.broadcast %168 : f32 to vector<8x128xf32>
    %175 = arith.mulf %157, %174 : vector<8x128xf32>
    %c1_21 = arith.constant 1 : index
    %c0_22 = arith.constant 0 : index
    %c0_23 = arith.constant 0 : index
    %176 = vector.load %arg4[%c1_21, %c0_22, %c0_23] : memref<2x8x128xf32, #tpu.memory_space<vmem>>, vector<1x8x128xf32>
    %177 = vector.shape_cast %176 : vector<1x8x128xf32> to vector<8x128xf32>
    %178 = vector.shape_cast %175 : vector<8x128xf32> to vector<1x8x128xf32>
    tpu.vector_store %arg4[%c1_21, %c0_22, %c0_23], %178 {strides = array<i32>} : memref<2x8x128xf32, #tpu.memory_space<vmem>>, vector<1x8x128xf32>,
    return
  }
}

</mosaic_0001>

<llo_original>
// kernel: tpu_custom_call.1
$region0: #{tpu_custom_call.1}
  #allocation0 [shape = 'u32[]', space=smem, size = 0x4, offset = 0x4, fixed_abs, tag = 'smem constant byte address 0x4 - core index']
  #allocation1 [shape = 'u32[144,128]{1,0:T(1,128)}', space=vmem, size = 0x12000, scoped, tag = 'internal scratch']
  #allocation2 [shape = 'f32[1]{0:T(128)S(6)}', space=smem, size = 0x200, scoped, tag = 'scoped memory for tpu_custom_call.1']
  %s0 = inlined_call_operand.vmem [shape: f32[16], index: 0, kind: input, shape index: {}]
  %s1 = inlined_call_operand.<no memory space> [shape: f32[1], index: 1, kind: input, shape index: {}]
  %s2 = inlined_call_operand.hbm [shape: f32[2,8,128], index: 2, kind: input, shape index: {}]
  %s3 = inlined_call_operand.hbm [shape: f32[2,8,128], index: 3, kind: input, shape index: {}]
  %s4 = inlined_call_operand.hbm [shape: f32[2,8,128], index: 4, kind: output, shape index: {}]
  %s5 = sld [smem:[#allocation0]]
  $region38: #{tpu_custom_call.1} parent=0
    _
  %s7 = ssub.s32 1, %s5
  %s8 = scalar_select 0, %s7, %s5
  %9 = sst [smem:[#allocation2]] %s1
  $region1: #{tpu_custom_call.1} parent=0
    #allocation3 [shape = 'u8[512]{0}', space=smem, size = 0x200, scoped, tag = 'input window, operand 0, single buffered']
    #allocation4 [shape = 's32[1]{0}', space=sflag, size = 0x4, scoped, tag = 'scoped memory for tpu_custom_call.1']
    #allocation5 [shape = 's32[1]{0}', space=sflag, size = 0x4, scoped, tag = 'scoped memory for tpu_custom_call.1']
    #allocation6 [shape = 's32[1]{0}', space=sflag, size = 0x4, scoped, tag = 'scoped memory for tpu_custom_call.1']
    #allocation7 [shape = 'u8[8192]{0}', space=vmem, size = 0x2000, scoped, tag = 'input window, operand 2, single buffered']
    #allocation8 [shape = 'u8[8192]{0}', space=vmem, size = 0x2000, scoped, tag = 'input window, operand 3, single buffered']
    #allocation9 [shape = 's32[1]{0}', space=sflag, size = 0x4, scoped, tag = 'scoped memory for tpu_custom_call.1']
    #allocation10 [shape = 'u8[8192]{0}', space=vmem, size = 0x2000, scoped, tag = 'output window, operand 0, single buffered']
    %10 = vsyncpa [#allocation6], 0
    %11 = vsyncpa [#allocation4], 0
    %12 = vsyncpa [#allocation9], 0
    %13 = vsyncpa [#allocation5], 0
    // Predicated region
    $region2: #{tpu_custom_call.1} parent=1 // pred_check
      _
    $region3: #{tpu_custom_call.1} parent=1 // pred_check_branch
      %15 = sbr.rel (0) target = $region5
    $region4: #{tpu_custom_call.1} parent=1 // pred_region
      %s17 = ssub.s32 16, 16
      %18 = vsyncadd [#allocation6], %s17
      %s20 = sshll.u32 %s0, 4
      %s21 = int_to_ptr.vmem [resolvable:$true] %s20
      %23 = dma.vmem_to_smem %s21, 16, [#allocation3], [#allocation6]
    $region5: #{tpu_custom_call.1} parent=1 // pred_fallthru
      _
    // Predicated region
    $region6: #{tpu_custom_call.1} parent=1 // pred_check
      _
    $region7: #{tpu_custom_call.1} parent=1 // pred_check_branch
      %25 = sbr.rel (0) target = $region9
    $region8: #{tpu_custom_call.1} parent=1 // pred_region
      _
    $region9: #{tpu_custom_call.1} parent=1 // pred_fallthru
      _
    // Predicated region
    $region10: #{tpu_custom_call.1} parent=1 // pred_check
      _
    $region11: #{tpu_custom_call.1} parent=1 // pred_check_branch
      %27 = sbr.rel (0) target = $region13
    $region12: #{tpu_custom_call.1} parent=1 // pred_region
      %s29 = ssub.s32 256, 256
      %30 = vsyncadd [#allocation4], %s29
      %s31 = sshll.u32 [#allocation7], 4
      %s32 = int_to_ptr.vmem [resolvable:$true] %s31
      %37 = dma.hbm_to_vmem [thread:$0]  %s2, 256, %s32, [#allocation4], 128, 128, 8
    $region13: #{tpu_custom_call.1} parent=1 // pred_fallthru
      _
    // Predicated region
    $region14: #{tpu_custom_call.1} parent=1 // pred_check
      _
    $region15: #{tpu_custom_call.1} parent=1 // pred_check_branch
      %39 = sbr.rel (0) target = $region17
    $region16: #{tpu_custom_call.1} parent=1 // pred_region
      %s41 = ssub.s32 256, 256
      %42 = vsyncadd [#allocation9], %s41
      %s43 = sshll.u32 [#allocation8], 4
      %s44 = int_to_ptr.vmem [resolvable:$true] %s43
      %49 = dma.hbm_to_vmem [thread:$0]  %s3, 256, %s44, [#allocation9], 128, 128, 8
    $region17: #{tpu_custom_call.1} parent=1 // pred_fallthru
      _
    // Predicated region
    $region18: #{tpu_custom_call.1} parent=1 // pred_check
      _
    $region19: #{tpu_custom_call.1} parent=1 // pred_check_branch
      %51 = sbr.rel (0) target = $region21
    $region20: #{tpu_custom_call.1} parent=1 // pred_region
      %52 = dma.done [#allocation6], 16
    $region21: #{tpu_custom_call.1} parent=1 // pred_fallthru
      _
    // Predicated region
    $region22: #{tpu_custom_call.1} parent=1 // pred_check
      _
    $region23: #{tpu_custom_call.1} parent=1 // pred_check_branch
      %54 = sbr.rel (0) target = $region25
    $region24: #{tpu_custom_call.1} parent=1 // pred_region
      %55 = dma.done [#allocation4], 256
    $region25: #{tpu_custom_call.1} parent=1 // pred_fallthru
      _
    // Predicated region
    $region26: #{tpu_custom_call.1} parent=1 // pred_check
      _
    $region27: #{tpu_custom_call.1} parent=1 // pred_check_branch
      %57 = sbr.rel (0) target = $region29
    $region28: #{tpu_custom_call.1} parent=1 // pred_region
      %58 = dma.done [#allocation9], 256
    $region29: #{tpu_custom_call.1} parent=1 // pred_fallthru
      _
    %59 = sfence
    %v60 = vlaneseq
    %v61 = vand.u32 %v60, 127
    %v62 = vand.u32 %v61, 1
    %vm63 = vcmp.eq.s32.totalorder %v62, 0
    %s64 = sld [smem:[#allocation3]]
    %s65 = sld [smem:[#allocation3 + $0x3]]
    %v66 = vstv %s64
    %v67 = vstv %s65
    %v68 = vsel %vm63, %v66, %v67
    %s69 = sld [smem:[#allocation3 + $0x4]]
    %s70 = sld [smem:[#allocation3 + $0x7]]
    %v71 = vstv %s69
    %v72 = vstv %s70
    %v73 = vsel %vm63, %v71, %v72
    %s74 = sld [smem:[#allocation3 + $0x1]]
    %s75 = sld [smem:[#allocation3 + $0x2]]
    %v76 = vstv %s74
    %v77 = vstv %s75
    %v78 = vsel %vm63, %v76, %v77
    %s79 = sld [smem:[#allocation3 + $0x5]]
    %s80 = sld [smem:[#allocation3 + $0x6]]
    %v81 = vstv %s79
    %v82 = vstv %s80
    %v83 = vsel %vm63, %v81, %v82
    %s84 = sld [smem:[#allocation3 + $0x8]]
    %s85 = sld [smem:[#allocation3 + $0xb]]
    %v86 = vstv %s84
    %v87 = vstv %s85
    %v88 = vsel %vm63, %v86, %v87
    %s89 = sld [smem:[#allocation3 + $0xc]]
    %s90 = sld [smem:[#allocation3 + $0xf]]
    %v91 = vstv %s89
    %v92 = vstv %s90
    %v93 = vsel %vm63, %v91, %v92
    %s94 = sld [smem:[#allocation3 + $0x9]]
    %s95 = sld [smem:[#allocation3 + $0xa]]
    %v96 = vstv %s94
    %v97 = vstv %s95
    %v98 = vsel %vm63, %v96, %v97
    %s99 = sld [smem:[#allocation3 + $0xd]]
    %s100 = sld [smem:[#allocation3 + $0xe]]
    %v101 = vstv %s99
    %v102 = vstv %s100
    %v103 = vsel %vm63, %v101, %v102
    %v104 = vld [vmem:[#allocation7] sm:$0xff]
    %s105 = scalar_lea.vmem [#allocation7], 8
    %v106 = vld [vmem:[%s105] sm:$0xff]
    %v107 = vmul.f32 %v104, %v104
    %v108 = vmul.f32 %v106, %v106
    %v109 = vadd.f32 %v107, %v108
    %110 = vadd.xlane.f32.xlu0 %v109
    %v111 = vpop.xlane.xlu0 %110
    %v112 = vrot.slane %v111, 4
    %v113 = vadd.f32 %v111, %v112
    %v114 = vrot.slane %v113, 2
    %v115 = vadd.f32 %v113, %v114
    %v116 = vrot.slane %v115, 1
    %v117 = vadd.f32 %v115, %v116
    %s118 = vtos %v117
    %s119 = smul.f32 %s118, 0.0009765625
    %121 = vrot.lane.b32.xlu0 %v104, 127
    %v122 = vpop.permute.xlu0 %121
    %124 = vrot.lane.b32.xlu0 %v104, 1
    %v125 = vpop.permute.xlu0 %124
    %v127 = vsel %vm63, 1, 0
    %vm128 = vcmp.eq.s32.totalorder %v127, 1
    %v129 = vsel %vm128, %v122, %v125
    %131 = vrot.lane.b32.xlu0 %v106, 127
    %v132 = vpop.permute.xlu0 %131
    %134 = vrot.lane.b32.xlu0 %v106, 1
    %v135 = vpop.permute.xlu0 %134
    %v137 = vsel %vm128, %v132, %v135
    %v138 = vmul.f32 %v68, %v104
    %v139 = vmul.f32 %v73, %v106
    %v140 = vsub.f32 %v138, %v139
    %v141 = vmul.f32 %v78, %v129
    %v142 = vadd.f32 %v140, %v141
    %v143 = vmul.f32 %v83, %v137
    %v144 = vsub.f32 %v142, %v143
    %v145 = vmul.f32 %v68, %v106
    %v146 = vmul.f32 %v73, %v104
    %v147 = vadd.f32 %v145, %v146
    %v148 = vmul.f32 %v78, %v137
    %v149 = vadd.f32 %v147, %v148
    %v150 = vmul.f32 %v83, %v129
    %v151 = vadd.f32 %v149, %v150
    %v152 = vmul.f32 %v144, %v144
    %v153 = vmul.f32 %v151, %v151
    %v154 = vadd.f32 %v152, %v153
    %155 = vadd.xlane.f32.xlu0 %v154
    %v156 = vpop.xlane.xlu0 %155
    %v157 = vrot.slane %v156, 4
    %v158 = vadd.f32 %v156, %v157
    %v159 = vrot.slane %v158, 2
    %v160 = vadd.f32 %v158, %v159
    %v161 = vrot.slane %v160, 1
    %v162 = vadd.f32 %v160, %v161
    %s163 = vtos %v162
    %s164 = smul.f32 %s163, 0.0009765625
    %s165 = sld [smem:[#allocation2]]
    %s166 = smul.f32 %s164, %s165
    %v167 = vstv %s166
    %v168 = vrsqrt.pop %v167
    %v169 = vmul.f32 %v167, %v168
    %vm170 = vcmp.eq.f32.partialorder %v167, inf
    %v171 = vsel %vm170, %v167, %v169
    %vm172 = vcmp.eq.f32.partialorder %v167, 0.0
    %v173 = vand.u32 %v167, 2147483648
    %v174 = vsel %vm172, %v173, %v171
    %s175 = vtos %v174
    %v176 = vld [vmem:[#allocation8] sm:$0xff]
    %v177 = vstv %s175
    %v178 = vmul.f32 %v177, %v176
    %v179 = vadd.f32 %v144, %v178
    %s180 = scalar_lea.vmem [#allocation8], 8
    %v181 = vld [vmem:[%s180] sm:$0xff]
    %v182 = vmul.f32 %v177, %v181
    %v183 = vadd.f32 %v151, %v182
    %185 = vrot.lane.b32.xlu0 %v179, 127
    %v186 = vpop.permute.xlu0 %185
    %188 = vrot.lane.b32.xlu0 %v179, 1
    %v189 = vpop.permute.xlu0 %188
    %v191 = vsel %vm128, %v186, %v189
    %193 = vrot.lane.b32.xlu0 %v183, 127
    %v194 = vpop.permute.xlu0 %193
    %196 = vrot.lane.b32.xlu0 %v183, 1
    %v197 = vpop.permute.xlu0 %196
    %v199 = vsel %vm128, %v194, %v197
    %v200 = vmul.f32 %v88, %v179
    %v201 = vmul.f32 %v93, %v183
    %v202 = vsub.f32 %v200, %v201
    %v203 = vmul.f32 %v98, %v191
    %v204 = vadd.f32 %v202, %v203
    %v205 = vmul.f32 %v103, %v199
    %v206 = vsub.f32 %v204, %v205
    %v207 = vmul.f32 %v88, %v183
    %v208 = vmul.f32 %v93, %v179
    %v209 = vadd.f32 %v207, %v208
    %v210 = vmul.f32 %v98, %v199
    %v211 = vadd.f32 %v209, %v210
    %v212 = vmul.f32 %v103, %v191
    %v213 = vadd.f32 %v211, %v212
    %v214 = vmul.f32 %v206, %v206
    %v215 = vmul.f32 %v213, %v213
    %v216 = vadd.f32 %v214, %v215
    %217 = vadd.xlane.f32.xlu0 %v216
    %v218 = vpop.xlane.xlu0 %217
    %v219 = vrot.slane %v218, 4
    %v220 = vadd.f32 %v218, %v219
    %v221 = vrot.slane %v220, 2
    %v222 = vadd.f32 %v220, %v221
    %v223 = vrot.slane %v222, 1
    %v224 = vadd.f32 %v222, %v223
    %s225 = vtos %v224
    %s226 = smul.f32 %s225, 0.0009765625
    %v227 = vstv %s119
    %v228 = vrsqrt.pop %v227
    %v229 = vmul.f32 %v227, %v228
    %vm230 = vcmp.eq.f32.partialorder %v227, inf
    %v231 = vsel %vm230, %v227, %v229
    %vm232 = vcmp.eq.f32.partialorder %v227, 0.0
    %v233 = vand.u32 %v227, 2147483648
    %v234 = vsel %vm232, %v233, %v231
    %s235 = vtos %v234
    %v236 = vstv %s226
    %v237 = vrsqrt.pop %v236
    %s238 = vtos %v237
    %s239 = smul.f32 %s235, %s238
    %v240 = vstv %s239
    %v241 = vmul.f32 %v206, %v240
    %242 = vst [vmem:[#allocation10] sm:$0xff] %v241
    %v243 = vmul.f32 %v213, %v240
    %s244 = scalar_lea.vmem [#allocation10], 8
    %245 = vst [vmem:[%s244] sm:$0xff] %v243
    // Predicated region
    $region30: #{tpu_custom_call.1} parent=1 // pred_check
      _
    $region31: #{tpu_custom_call.1} parent=1 // pred_check_branch
      %247 = sbr.rel (0) target = $region33
    $region32: #{tpu_custom_call.1} parent=1 // pred_region
      %s249 = ssub.s32 256, 256
      %250 = vsyncadd [#allocation5], %s249
      %s251 = sshll.u32 [#allocation10], 4
      %s252 = int_to_ptr.vmem [resolvable:$true] %s251
      %257 = dma.vmem_to_hbm [thread:$0]  %s252, 256, %s4, [#allocation5], 128, 128, 8
    $region33: #{tpu_custom_call.1} parent=1 // pred_fallthru
      _
    // Predicated region
    $region34: #{tpu_custom_call.1} parent=1 // pred_check
      _
    $region35: #{tpu_custom_call.1} parent=1 // pred_check_branch
      %259 = sbr.rel (0) target = $region37
    $region36: #{tpu_custom_call.1} parent=1 // pred_region
      %260 = dma.done [#allocation5], 256
    $region37: #{tpu_custom_call.1} parent=1 // pred_fallthru
      _
    %261 = vsyncpa [#allocation4], 1
    %262 = vsyncpa [#allocation9], 1
    %263 = vsyncpa [#allocation5], 1
    %264 = vsyncpa [#allocation6], 1

</llo_original>
